<compile_context>
chip_gen: v7x
topology: tpu7x:2x2x1
jax: 0.10.0
libtpu: 0.0.40
codegen_flags: <defaults>
</compile_context>

<pallas_src>
import math

import jax
import jax.numpy as jnp
from jax.experimental import pallas as pl
from jax.experimental.pallas import tpu as pltpu

EPS = 1e-12


def _round_up(x, m):
    return (x + m - 1) // m * m


def _make_kernel(hidden: int, hidden_padded: int):
    """Kernel factory; `hidden` is the real (un-padded) hidden size."""

    def kernel(x_ref, g_ref, bln_ref, w_ref, bw_ref, o_ref, h_ref):
        # x_ref  : (tm, Hp) row tile, native dtype; its block index is constant
        #          across j, so it is DMA'd from HBM once per row tile.
        # g_ref  : (1, Hp)  LayerNorm weight (f32, zero in padded cols)
        # bln_ref: (1, Hp)  LayerNorm bias   (f32, zero in padded cols)
        # w_ref  : (Hp, tn) bf16 N-slab of the Linear weight
        # bw_ref : (1, tn)  f32  N-slab of the Linear bias
        # o_ref  : (tm, tn) output slab
        # h_ref  : (tm, Hp) bf16 scratch holding LayerNorm(x); computed once per
        #          row tile (j == 0) and reused by every N-slab.
        j = pl.program_id(1)
        tn = w_ref.shape[1]

        @pl.when(j == 0)
        def _():
            x = x_ref[...].astype(jnp.float32)
            inv_h = 1.0 / hidden
            u = jnp.sum(x, axis=-1, keepdims=True) * inv_h
            if hidden == hidden_padded:
                xc = x - u
            else:
                col = jax.lax.broadcasted_iota(jnp.int32, x.shape, 1)
                xc = jnp.where(col < hidden, x - u, 0.0)  # exclude padded cols
            var = jnp.sum(xc * xc, axis=-1, keepdims=True) * inv_h
            xn = xc * jax.lax.rsqrt(var + EPS)            # rsqrt -> EUP slot
            h = xn * g_ref[...] + bln_ref[...]            # padded cols stay 0
            h_ref[...] = h.astype(jnp.bfloat16)

        # --- sublayer Linear on the MXU (bf16 inputs, f32 accumulation) ---
        y = jnp.dot(h_ref[...], w_ref[...], preferred_element_type=jnp.float32)
        y = y + bw_ref[...]

        # --- dropout (eval mode => identity) + residual add on this N window ---
        # TODO(synk): training-mode dropout would use pltpu.prng_seed/prng_random_bits.
        start = pl.multiple_of(j * tn, 128)
        x_res = x_ref[:, pl.ds(start, tn)].astype(jnp.float32)
        o_ref[...] = (x_res + y).astype(o_ref.dtype)

    return kernel


def sublayer_connection(x, ln_weight, ln_bias, w, b, *, out_dtype=None):
    """x: (B, S, H). Returns x + Linear(LayerNorm(x)); Linear runs in bf16 on the MXU."""
    B, S, H = x.shape
    M = B * S
    Hp = _round_up(H, 128)                         # lane-dense hidden
    out_dtype = jnp.dtype(out_dtype) if out_dtype is not None else x.dtype
    x_bytes = jnp.dtype(x.dtype).itemsize
    o_bytes = jnp.dtype(out_dtype).itemsize

    # --- VMEM budget: query the chip, leave ~20% headroom below physical ---
    vmem_cap = 64 * 1024 * 1024                    # conservative default (v7x)
    try:
        cap = getattr(pltpu.get_tpu_info(), "vmem_capacity_bytes", None)
        if cap:
            vmem_cap = int(cap)
    except Exception:
        pass
    vmem_budget = int(vmem_cap * 0.8)

    def vmem_use(tm_, tn_):
        return (2 * tm_ * Hp * x_bytes             # x row tiles (double-buffered)
                + 2 * Hp * tn_ * 2                 # bf16 weight slabs
                + 2 * tm_ * tn_ * o_bytes          # output slabs
                + tm_ * Hp * 2                     # LN-result scratch (bf16)
                + 8 * Hp * 4)                      # LN / bias constants

    # --- tile selection ---
    # Row tile large enough to amortize pipeline overhead and (for streamed W)
    # reach the MXU roofline; capped by the actual number of rows.
    tm = min(512, _round_up(M, 8))
    if vmem_use(tm, Hp) <= vmem_budget:
        tn = Hp                                    # resident W: single DMA for all i
    else:
        tn = math.gcd(Hp, 512)                     # streamed N-slabs (multiple of 128)
        while tm > 256 and vmem_use(tm, tn) > vmem_budget:
            tm = _round_up(tm // 2, 8)
    Mp = _round_up(M, tm)
    gm, gn = Mp // tm, Hp // tn
    w_resident = (gn == 1)

    # --- operand prep; skip pad round trips when shapes are already aligned ---
    pad_rows, pad_cols = Mp - M, Hp - H
    x2 = x.reshape(M, H)
    if pad_rows or pad_cols:
        x2 = jnp.pad(x2, ((0, pad_rows), (0, pad_cols)))
    g2 = ln_weight.astype(jnp.float32)
    bl2 = ln_bias.astype(jnp.float32)
    bw2 = b.astype(jnp.float32)
    w2 = w.astype(jnp.bfloat16)
    if pad_cols:
        g2 = jnp.pad(g2, (0, pad_cols))
        bl2 = jnp.pad(bl2, (0, pad_cols))
        bw2 = jnp.pad(bw2, (0, pad_cols))
        w2 = jnp.pad(w2, ((0, pad_cols), (0, pad_cols)))
    g2, bl2, bw2 = g2.reshape(1, Hp), bl2.reshape(1, Hp), bw2.reshape(1, Hp)

    w_hbm_bytes = Hp * Hp * 2 * (1 if w_resident else gm)
    cost = pl.CostEstimate(
        flops=2 * Mp * Hp * Hp + 10 * Mp * Hp,
        transcendentals=Mp,
        bytes_accessed=Mp * Hp * x_bytes + Mp * Hp * o_bytes + w_hbm_bytes + 4 * Hp * 4,
    )

    vmem_limit = min(vmem_budget, max(2 * vmem_use(tm, tn), 32 * 1024 * 1024))

    w_index = (lambda i, j: (0, 0)) if w_resident else (lambda i, j: (0, j))
    bw_index = (lambda i, j: (0, 0)) if w_resident else (lambda i, j: (0, j))

    out = pl.pallas_call(
        _make_kernel(H, Hp),
        out_shape=jax.ShapeDtypeStruct((Mp, Hp), out_dtype),
        grid_spec=pltpu.PrefetchScalarGridSpec(
            num_scalar_prefetch=0,
            grid=(gm, gn),
            in_specs=[
                pl.BlockSpec((tm, Hp), lambda i, j: (i, 0)),   # x rows (full hidden)
                pl.BlockSpec((1, Hp), lambda i, j: (0, 0)),    # LN weight (constant)
                pl.BlockSpec((1, Hp), lambda i, j: (0, 0)),    # LN bias   (constant)
                pl.BlockSpec((Hp, tn), w_index),               # Linear W slab
                pl.BlockSpec((1, tn), bw_index),               # Linear bias slab
            ],
            out_specs=pl.BlockSpec((tm, tn), lambda i, j: (i, j)),
            scratch_shapes=[pltpu.VMEM((tm, Hp), jnp.bfloat16)],   # cached LN(x)
        ),
        compiler_params=pltpu.CompilerParams(
            # j carries the LN scratch across N-slabs -> must be "arbitrary";
            # i (row tiles) is independent -> megacore-parallel on v7x.
            dimension_semantics=("parallel", "arbitrary"),
            vmem_limit_bytes=vmem_limit),
        cost_estimate=cost,
    )(x2, g2, bl2, w2, bw2)

    if pad_rows or pad_cols:
        out = out[:M, :H]
    return out.reshape(B, S, H)


def _reference(x, ln_weight, ln_bias, w, b):
    u = jnp.mean(x, axis=-1, keepdims=True)
    s = jnp.mean((x - u) ** 2, axis=-1, keepdims=True)
    xn = (x - u) / jnp.sqrt(s + EPS)
    h = ln_weight * xn + ln_bias
    y = jnp.einsum("bsh,hk->bsk", h, w) + b
    return x + y


if __name__ == "__main__":
    key = jax.random.PRNGKey(0)
    B, S, H = 2, 8, 32  # batch=2, seq=8, hidden=32

    k1, k2, k3 = jax.random.split(key, 3)
    x = jax.random.normal(k1, (B, S, H), dtype=jnp.float32)

    # LN weight=1, bias=0 as in module __init__; sublayer Linear from the PRNG.
    ln_weight = jnp.ones((H,), dtype=jnp.float32)
    ln_bias = jnp.zeros((H,), dtype=jnp.float32)
    w = jax.random.normal(k2, (H, H), dtype=jnp.float32) * 0.02
    b = jax.random.normal(k3, (H,), dtype=jnp.float32) * 0.02

    out = sublayer_connection(x, ln_weight, ln_bias, w, b)
    out = jax.block_until_ready(out)

    ref = _reference(x, ln_weight, ln_bias, w, b)
    assert out.shape == (B, S, H)
    # bf16 MXU path for the Linear => loosened tolerance vs the pure-f32 reference
    # (LN stats and accumulation remain f32).
    assert jnp.allclose(out, ref, atol=1e-2, rtol=1e-2), "mismatch vs reference"

    print("KERNEL_OK")
</pallas_src>

<mosaic_0001>
module attributes {stable_mosaic.version = 11 : i64} {
  func.func @kernel(%arg0: i32, %arg1: i32, %arg2: memref<16x128xf32, #tpu.memory_space<vmem>>, %arg3: memref<1x128xf32, #tpu.memory_space<vmem>>, %arg4: memref<1x128xf32, #tpu.memory_space<vmem>>, %arg5: memref<128x128xbf16, #tpu.memory_space<vmem>>, %arg6: memref<1x128xf32, #tpu.memory_space<vmem>>, %arg7: memref<16x128xf32, #tpu.memory_space<vmem>>, %arg8: memref<16x128xbf16, #tpu.memory_space<vmem>>) attributes {dimension_semantics = [#tpu.dimension_semantics<parallel>, #tpu.dimension_semantics<arbitrary>], iteration_bounds = array<i64: 1, 1>, scalar_prefetch = 0 : i64, scratch_operands = 1 : i64, tpu.core_type = #tpu.core_type<tc>, window_params = [{transform_indices = @transform_0, window_bounds = array<i64: 16, 128>}, {pipeline_mode = #tpu.pipeline_mode<synchronous>, transform_indices = @transform_1, window_bounds = array<i64: 1, 128>}, {pipeline_mode = #tpu.pipeline_mode<synchronous>, transform_indices = @transform_2, window_bounds = array<i64: 1, 128>}, {pipeline_mode = #tpu.pipeline_mode<synchronous>, transform_indices = @transform_3, window_bounds = array<i64: 128, 128>}, {pipeline_mode = #tpu.pipeline_mode<synchronous>, transform_indices = @transform_4, window_bounds = array<i64: 1, 128>}, {transform_indices = @transform_5, window_bounds = array<i64: 16, 128>}]} {
    %c0_i32 = arith.constant 0 : i32
    %0 = arith.cmpi eq, %arg1, %c0_i32 : i32
    %1 = arith.extui %0 : i1 to i32
    %c0_i32_0 = arith.constant 0 : i32
    %2 = arith.cmpi ne, %1, %c0_i32_0 : i32
    scf.if %2 {
      %c0_9 = arith.constant 0 : index
      %c0_10 = arith.constant 0 : index
      %15 = vector.load %arg2[%c0_9, %c0_10] : memref<16x128xf32, #tpu.memory_space<vmem>>, vector<16x128xf32>
      %cst_11 = arith.constant dense<0.000000e+00> : vector<16xf32>
      %16 = vector.multi_reduction <add>, %15, %cst_11 [1] : vector<16x128xf32> to vector<16xf32>
      %17 = vector.shape_cast %16 : vector<16xf32> to vector<16x1xf32>
      %cst_12 = arith.constant 3.125000e-02 : f32
      %18 = vector.broadcast %cst_12 : f32 to vector<16x1xf32>
      %19 = arith.mulf %17, %18 : vector<16x1xf32>
      %20 = tpu.iota {dimensions = array<i32: 1>} : vector<16x128xi32>
      %c32_i32 = arith.constant 32 : i32
      %21 = vector.broadcast %c32_i32 : i32 to vector<16x128xi32>
      %22 = arith.cmpi slt, %20, %21 : vector<16x128xi32>
      %23 = vector.broadcast %19 : vector<16x1xf32> to vector<16x128xf32>
      %24 = arith.subf %15, %23 : vector<16x128xf32>
      %cst_13 = arith.constant 0.000000e+00 : f32
      %25 = vector.broadcast %cst_13 : f32 to vector<16x128xf32>
      %26 = arith.select %22, %24, %25 : vector<16x128xi1>, vector<16x128xf32>
      %27 = arith.mulf %26, %26 : vector<16x128xf32>
      %cst_14 = arith.constant dense<0.000000e+00> : vector<16xf32>
      %28 = vector.multi_reduction <add>, %27, %cst_14 [1] : vector<16x128xf32> to vector<16xf32>
      %29 = vector.shape_cast %28 : vector<16xf32> to vector<16x1xf32>
      %cst_15 = arith.constant 3.125000e-02 : f32
      %30 = vector.broadcast %cst_15 : f32 to vector<16x1xf32>
      %31 = arith.mulf %29, %30 : vector<16x1xf32>
      %cst_16 = arith.constant 9.99999996E-13 : f32
      %32 = vector.broadcast %cst_16 : f32 to vector<16x1xf32>
      %33 = arith.addf %31, %32 : vector<16x1xf32>
      %34 = math.rsqrt %33 : vector<16x1xf32>
      %35 = vector.broadcast %34 : vector<16x1xf32> to vector<16x128xf32>
      %36 = arith.mulf %26, %35 : vector<16x128xf32>
      %c0_17 = arith.constant 0 : index
      %c0_18 = arith.constant 0 : index
      %37 = vector.load %arg3[%c0_17, %c0_18] : memref<1x128xf32, #tpu.memory_space<vmem>>, vector<1x128xf32>
      %38 = vector.broadcast %37 : vector<1x128xf32> to vector<16x128xf32>
      %39 = arith.mulf %36, %38 : vector<16x128xf32>
      %c0_19 = arith.constant 0 : index
      %c0_20 = arith.constant 0 : index
      %40 = vector.load %arg4[%c0_19, %c0_20] : memref<1x128xf32, #tpu.memory_space<vmem>>, vector<1x128xf32>
      %41 = vector.broadcast %40 : vector<1x128xf32> to vector<16x128xf32>
      %42 = arith.addf %39, %41 : vector<16x128xf32>
      %43 = arith.truncf %42 : vector<16x128xf32> to vector<16x128xbf16>
      %c0_21 = arith.constant 0 : index
      %c0_22 = arith.constant 0 : index
      %44 = vector.load %arg8[%c0_21, %c0_22] : memref<16x128xbf16, #tpu.memory_space<vmem>>, vector<16x128xbf16>
      tpu.vector_store %arg8[%c0_21, %c0_22], %43 {strides = array<i32>} : memref<16x128xbf16, #tpu.memory_space<vmem>>, vector<16x128xbf16>,
    } else {
    }
    %c0 = arith.constant 0 : index
    %c0_1 = arith.constant 0 : index
    %3 = vector.load %arg8[%c0, %c0_1] : memref<16x128xbf16, #tpu.memory_space<vmem>>, vector<16x128xbf16>
    %c0_2 = arith.constant 0 : index
    %c0_3 = arith.constant 0 : index
    %4 = vector.load %arg5[%c0_2, %c0_3] : memref<128x128xbf16, #tpu.memory_space<vmem>>, vector<128x128xbf16>
    %cst = arith.constant dense<0.000000e+00> : vector<16x128xf32>
    %5 = tpu.matmul %3, %4, %cst {dimension_numbers = #tpu.dot_dimension_numbers<[1], [0], [0], [1], [0, 0, 1, 1], [], []>} : vector<16x128xbf16>, vector<128x128xbf16>, vector<16x128xf32> -> vector<16x128xf32>
    %c0_4 = arith.constant 0 : index
    %c0_5 = arith.constant 0 : index
    %6 = vector.load %arg6[%c0_4, %c0_5] : memref<1x128xf32, #tpu.memory_space<vmem>>, vector<1x128xf32>
    %7 = vector.broadcast %6 : vector<1x128xf32> to vector<16x128xf32>
    %8 = arith.addf %5, %7 : vector<16x128xf32>
    %c128_i32 = arith.constant 128 : i32
    %9 = arith.muli %arg1, %c128_i32 : i32
    %10 = tpu.assume_multiple %9, 128 : i32
    %c0_6 = arith.constant 0 : index
    %11 = arith.index_cast %10 : i32 to index
    %12 = vector.load %arg2[%c0_6, %11] : memref<16x128xf32, #tpu.memory_space<vmem>>, vector<16x128xf32>
    %13 = arith.addf %12, %8 : vector<16x128xf32>
    %c0_7 = arith.constant 0 : index
    %c0_8 = arith.constant 0 : index
    %14 = vector.load %arg7[%c0_7, %c0_8] : memref<16x128xf32, #tpu.memory_space<vmem>>, vector<16x128xf32>
    tpu.vector_store %arg7[%c0_7, %c0_8], %13 {strides = array<i32>} : memref<16x128xf32, #tpu.memory_space<vmem>>, vector<16x128xf32>,
    return
  }
  func.func @transform_0(%arg0: i32, %arg1: i32) -> (i32, i32) {
    %c0_i32 = arith.constant 0 : i32
    %c0_i32_0 = arith.constant 0 : i32
    return %arg0, %c0_i32 : i32, i32
  }
  func.func @transform_1(%arg0: i32, %arg1: i32) -> (i32, i32) {
    %c0_i32 = arith.constant 0 : i32
    %c0_i32_0 = arith.constant 0 : i32
    %c0_i32_1 = arith.constant 0 : i32
    return %c0_i32, %c0_i32_0 : i32, i32
  }
  func.func @transform_2(%arg0: i32, %arg1: i32) -> (i32, i32) {
    %c0_i32 = arith.constant 0 : i32
    %c0_i32_0 = arith.constant 0 : i32
    %c0_i32_1 = arith.constant 0 : i32
    return %c0_i32, %c0_i32_0 : i32, i32
  }
  func.func @transform_3(%arg0: i32, %arg1: i32) -> (i32, i32) {
    %c0_i32 = arith.constant 0 : i32
    %c0_i32_0 = arith.constant 0 : i32
    %c0_i32_1 = arith.constant 0 : i32
    return %c0_i32, %c0_i32_0 : i32, i32
  }
  func.func @transform_4(%arg0: i32, %arg1: i32) -> (i32, i32) {
    %c0_i32 = arith.constant 0 : i32
    %c0_i32_0 = arith.constant 0 : i32
    %c0_i32_1 = arith.constant 0 : i32
    return %c0_i32, %c0_i32_0 : i32, i32
  }
  func.func @transform_5(%arg0: i32, %arg1: i32) -> (i32, i32) {
    %c0_i32 = arith.constant 0 : i32
    return %arg0, %arg1 : i32, i32
  }
}

</mosaic_0001>

<llo_original>
// kernel: tpu_custom_call.1
$region0: #{tpu_custom_call.1}
  #allocation0 [shape = 'u32[]', space=smem, size = 0x4, offset = 0x4, fixed_abs, tag = 'smem constant byte address 0x4 - core index']
  #allocation1 [shape = 'u32[144,128]{1,0:T(1,128)}', space=vmem, size = 0x12000, scoped, tag = 'internal scratch']
  #allocation2 [shape = 'bf16[16,128]{1,0:T(16,128)(2,1)}', space=vmem, size = 0x1000, scoped, tag = 'scratch operand']
  %s0 = inlined_call_operand.hbm [shape: f32[16,128], index: 0, kind: input, shape index: {}]
  %s1 = inlined_call_operand.vmem [shape: f32[1,128], index: 1, kind: input, shape index: {}]
  %s2 = inlined_call_operand.vmem [shape: f32[1,128], index: 2, kind: input, shape index: {}]
  %s3 = inlined_call_operand.hbm [shape: bf16[128,128], index: 3, kind: input, shape index: {}]
  %s4 = inlined_call_operand.vmem [shape: f32[1,128], index: 4, kind: input, shape index: {}]
  %s5 = inlined_call_operand.hbm [shape: f32[16,128], index: 5, kind: output, shape index: {}]
  %s6 = sld [smem:[#allocation0]]
  $region42: #{tpu_custom_call.1} parent=0
    _
  %s8 = ssub.s32 1, %s6
  %s9 = scalar_select 0, %s8, %s6
  $region1: #{tpu_custom_call.1} parent=0
    #allocation3 [shape = 'u8[8192]{0}', space=vmem, size = 0x2000, scoped, tag = 'input window, operand 0, single buffered']
    #allocation4 [shape = 's32[1]{0}', space=sflag, size = 0x4, scoped, tag = 'scoped memory for tpu_custom_call.1']
    #allocation5 [shape = 's32[1]{0}', space=sflag, size = 0x4, scoped, tag = 'scoped memory for tpu_custom_call.1']
    #allocation6 [shape = 'u8[32768]{0}', space=vmem, size = 0x8000, scoped, tag = 'input window, operand 3, single buffered']
    #allocation7 [shape = 's32[1]{0}', space=sflag, size = 0x4, scoped, tag = 'scoped memory for tpu_custom_call.1']
    #allocation8 [shape = 'u8[8192]{0}', space=vmem, size = 0x2000, scoped, tag = 'output window, operand 0, single buffered']
    %10 = vsyncpa [#allocation4], 0
    %11 = vsyncpa [#allocation7], 0
    %12 = vsyncpa [#allocation5], 0
    // Predicated region
    $region2: #{tpu_custom_call.1} parent=1 // pred_check
      _
    $region3: #{tpu_custom_call.1} parent=1 // pred_check_branch
      %14 = sbr.rel (0) target = $region5
    $region4: #{tpu_custom_call.1} parent=1 // pred_region
      %s16 = ssub.s32 256, 256
      %17 = vsyncadd [#allocation4], %s16
      %s18 = sshll.u32 [#allocation3], 4
      %s19 = int_to_ptr.vmem [resolvable:$true] %s18
      %24 = dma.hbm_to_vmem [thread:$0]  %s0, 256, %s19, [#allocation4], 128, 128, 8
    $region5: #{tpu_custom_call.1} parent=1 // pred_fallthru
      _
    // Predicated region
    $region6: #{tpu_custom_call.1} parent=1 // pred_check
      _
    $region7: #{tpu_custom_call.1} parent=1 // pred_check_branch
      %26 = sbr.rel (0) target = $region9
    $region8: #{tpu_custom_call.1} parent=1 // pred_region
      _
    $region9: #{tpu_custom_call.1} parent=1 // pred_fallthru
      _
    // Predicated region
    $region10: #{tpu_custom_call.1} parent=1 // pred_check
      _
    $region11: #{tpu_custom_call.1} parent=1 // pred_check_branch
      %28 = sbr.rel (0) target = $region13
    $region12: #{tpu_custom_call.1} parent=1 // pred_region
      _
    $region13: #{tpu_custom_call.1} parent=1 // pred_fallthru
      _
    // Predicated region
    $region14: #{tpu_custom_call.1} parent=1 // pred_check
      _
    $region15: #{tpu_custom_call.1} parent=1 // pred_check_branch
      %30 = sbr.rel (0) target = $region17
    $region16: #{tpu_custom_call.1} parent=1 // pred_region
      %s32 = ssub.s32 1024, 1024
      %33 = vsyncadd [#allocation7], %s32
      %s34 = sshll.u32 [#allocation6], 4
      %s35 = int_to_ptr.vmem [resolvable:$true] %s34
      %40 = dma.hbm_to_vmem [thread:$0]  %s3, 1024, %s35, [#allocation7], 64, 64, 4
    $region17: #{tpu_custom_call.1} parent=1 // pred_fallthru
      _
    // Predicated region
    $region18: #{tpu_custom_call.1} parent=1 // pred_check
      _
    $region19: #{tpu_custom_call.1} parent=1 // pred_check_branch
      %42 = sbr.rel (0) target = $region21
    $region20: #{tpu_custom_call.1} parent=1 // pred_region
      _
    $region21: #{tpu_custom_call.1} parent=1 // pred_fallthru
      _
    // Predicated region
    $region22: #{tpu_custom_call.1} parent=1 // pred_check
      _
    $region23: #{tpu_custom_call.1} parent=1 // pred_check_branch
      %44 = sbr.rel (0) target = $region25
    $region24: #{tpu_custom_call.1} parent=1 // pred_region
      %45 = dma.done [#allocation4], 256
    $region25: #{tpu_custom_call.1} parent=1 // pred_fallthru
      _
    // Predicated region
    $region26: #{tpu_custom_call.1} parent=1 // pred_check
      _
    $region27: #{tpu_custom_call.1} parent=1 // pred_check_branch
      %47 = sbr.rel (0) target = $region29
    $region28: #{tpu_custom_call.1} parent=1 // pred_region
      %48 = dma.done [#allocation7], 1024
    $region29: #{tpu_custom_call.1} parent=1 // pred_fallthru
      _
    %p50 = scmp.eq.s32.totalorder 0, 0
    // Predicated region
    $region30: #{tpu_custom_call.1} parent=1 // pred_check
      %p51 = pneg %p50
    $region31: #{tpu_custom_call.1} parent=1 // pred_check_branch
      %53 = sbr.rel (%p51) target = $region33
    $region32: #{tpu_custom_call.1} parent=1 // pred_region
      %v54 = vld [vmem:[#allocation3] sm:$0xff]
      %v55 = vld [vmem:[#allocation3 + $0x8] sm:$0xff]
      %56 = vadd.xlane.f32.xlu0 %v54
      %v57 = vpop.xlane.xlu0 %56
      %58 = vadd.xlane.f32.xlu0 %v55
      %v59 = vpop.xlane.xlu0 %58
      %v60 = vmul.f32 %v57, 0.03125
      %v61 = vmul.f32 %v59, 0.03125
      %v62 = vlaneseq
      %v63 = vand.u32 %v62, 127
      %vm64 = vcmp.lt.s32.totalorder %v63, 32
      %v65 = vsub.f32 %v54, %v60
      %v66 = vsub.f32 %v55, %v61
      %v67 = vsel %vm64, %v65, 0.0
      %v68 = vsel %vm64, %v66, 0.0
      %v69 = vmul.f32 %v67, %v67
      %v70 = vmul.f32 %v68, %v68
      %71 = vadd.xlane.f32.xlu0 %v69
      %v72 = vpop.xlane.xlu0 %71
      %73 = vadd.xlane.f32.xlu0 %v70
      %v74 = vpop.xlane.xlu0 %73
      %v75 = vmul.f32 %v72, 0.03125
      %v76 = vmul.f32 %v74, 0.03125
      %v77 = vadd.f32 %v75, 1e-12
      %v78 = vadd.f32 %v76, 1e-12
      %v79 = vrsqrt.pop %v77
      %v80 = vrsqrt.pop %v78
      %v81 = vmul.f32 %v67, %v79
      %v82 = vmul.f32 %v68, %v80
      %v83 = vld [vmem:[%s1] sm:$0x1]
      %v85 = vlaneseq
      %v86 = vshrl.u32 %v85, 7
      %v87 = vsub.s32 0, %v86
      %v88 = vrot.slane %v83, %v87
      %v90 = vmul.f32 %v81, %v88
      %v91 = vmul.f32 %v82, %v88
      %v92 = vld [vmem:[%s2] sm:$0x1]
      %v94 = vlaneseq
      %v95 = vshrl.u32 %v94, 7
      %v96 = vsub.s32 0, %v95
      %v97 = vrot.slane %v92, %v96
      %v99 = vadd.f32 %v90, %v97
      %v100 = vadd.f32 %v91, %v97
      %v101 = vpack.c.bf16 %v100, %v99
      %102 = vst [vmem:[#allocation2] sm:$0xff] %v101
    $region33: #{tpu_custom_call.1} parent=1 // pred_fallthru
      _
    %v103 = vld [vmem:[#allocation2] sm:$0xff]
    %v104 = vld [vmem:[#allocation6] sm:$0xf]
    %v105 = vld [vmem:[#allocation6 + $0x4] sm:$0xf]
    %v106 = vld [vmem:[#allocation6 + $0x8] sm:$0xf]
    %v107 = vld [vmem:[#allocation6 + $0xc] sm:$0xf]
    %v108 = vld [vmem:[#allocation6 + $0x10] sm:$0xf]
    %v109 = vld [vmem:[#allocation6 + $0x14] sm:$0xf]
    %v110 = vld [vmem:[#allocation6 + $0x18] sm:$0xf]
    %v111 = vld [vmem:[#allocation6 + $0x1c] sm:$0xf]
    %v112 = vld [vmem:[#allocation6 + $0x20] sm:$0xf]
    %v113 = vld [vmem:[#allocation6 + $0x24] sm:$0xf]
    %v114 = vld [vmem:[#allocation6 + $0x28] sm:$0xf]
    %v115 = vld [vmem:[#allocation6 + $0x2c] sm:$0xf]
    %v116 = vld [vmem:[#allocation6 + $0x30] sm:$0xf]
    %v117 = vld [vmem:[#allocation6 + $0x34] sm:$0xf]
    %v118 = vld [vmem:[#allocation6 + $0x38] sm:$0xf]
    %v119 = vld [vmem:[#allocation6 + $0x3c] sm:$0xf]
    %v120 = vld [vmem:[%s4] sm:$0x1]
    %v122 = vlaneseq
    %v123 = vshrl.u32 %v122, 7
    %v124 = vsub.s32 0, %v123
    %v125 = vrot.slane %v120, %v124
    %v143 = vunpack.c.l.b16 %v104
    %v144 = vunpack.c.l.b16 %v105
    %v145 = vunpack.c.l.b16 %v106
    %v146 = vunpack.c.l.b16 %v107
    %v147 = vunpack.c.l.b16 %v108
    %v148 = vunpack.c.l.b16 %v109
    %v149 = vunpack.c.l.b16 %v110
    %v150 = vunpack.c.l.b16 %v111
    %v151 = vunpack.c.l.b16 %v112
    %v152 = vunpack.c.l.b16 %v113
    %v153 = vunpack.c.l.b16 %v114
    %v154 = vunpack.c.l.b16 %v115
    %v155 = vunpack.c.l.b16 %v116
    %v156 = vunpack.c.l.b16 %v117
    %v157 = vunpack.c.l.b16 %v118
    %v158 = vunpack.c.l.b16 %v119
    %v159 = vpack.c.b16 %v144, %v143
    %v160 = vpack.c.b16 %v146, %v145
    %v161 = vpack.c.b16 %v148, %v147
    %v162 = vpack.c.b16 %v150, %v149
    %v163 = vpack.c.b16 %v152, %v151
    %v164 = vpack.c.b16 %v154, %v153
    %v165 = vpack.c.b16 %v156, %v155
    %v166 = vpack.c.b16 %v158, %v157
    %175 = vmatprep.subr.bf16.mxu0 0
    %176 = vmatpush1.bf16.msra.mxu0 %v159
    %177 = vmatprep.subr.bf16.mxu0 0
    %178 = vmatpush1.bf16.msra.mxu0 %v160
    %179 = vmatprep.subr.bf16.mxu0 0
    %180 = vmatpush1.bf16.msra.mxu0 %v161
    %181 = vmatprep.subr.bf16.mxu0 0
    %182 = vmatpush1.bf16.msra.mxu0 %v162
    %183 = vmatprep.subr.bf16.mxu0 0
    %184 = vmatpush1.bf16.msra.mxu0 %v163
    %185 = vmatprep.subr.bf16.mxu0 0
    %186 = vmatpush1.bf16.msra.mxu0 %v164
    %187 = vmatprep.subr.bf16.mxu0 0
    %188 = vmatpush1.bf16.msra.mxu0 %v165
    %189 = vmatprep.subr.bf16.mxu0 0
    %190 = vmatpush1.bf16.msra.mxu0 %v166
    %191 = vmatprep.subr.bf16.mxu0 0
    %192 = vmatpush1.bf16.msra.mxu0 0
    %193 = vmatprep.subr.bf16.mxu0 0
    %194 = vmatpush1.bf16.msra.mxu0 0
    %195 = vmatprep.subr.bf16.mxu0 0
    %196 = vmatpush1.bf16.msra.mxu0 0
    %197 = vmatprep.subr.bf16.mxu0 0
    %198 = vmatpush1.bf16.msra.mxu0 0
    %199 = vmatprep.subr.bf16.mxu0 0
    %200 = vmatpush1.bf16.msra.mxu0 0
    %201 = vmatprep.subr.bf16.mxu0 0
    %202 = vmatpush1.bf16.msra.mxu0 0
    %203 = vmatprep.subr.bf16.mxu0 0
    %204 = vmatpush1.bf16.msra.mxu0 0
    %205 = vmatprep.subr.bf16.mxu0 0
    %206 = vmatpush1.bf16.msra.mxu0 0
    %207 = vmatprep.mubr.bf16.mxu0 0
    %208 = vmatmul.mubr.bf16.gmra.mrb[0].mxu0 %v103
    %v209 = vpop.f32.mrb[0].mxu0
    %v210 = vadd.f32 %v125, %v209
    %v211 = vpop.f32.mrb[0].mxu0
    %v212 = vpop.f32.mrb[0].mxu0
    %v213 = vadd.f32 %v125, %v212
    %v214 = vpop.f32.mrb[0].mxu0
    %215 = vdwg.mxu0
    %s216 = smul.u32 0, 128
    %s217 = sshra.s32 %s216, 7
    %s218 = sand.u32 %s216, 127
    %s219 = scalar_lea.vmem [#allocation3], %s217
    %v220 = vld [vmem:[%s219] sm:$0xff]
    %v221 = vld [vmem:[%s219 + $0x8] sm:$0xff]
    %v222 = vadd.f32 %v220, %v210
    %v223 = vadd.f32 %v221, %v213
    %224 = vst [vmem:[#allocation8] sm:$0xff] %v222
    %225 = vst [vmem:[#allocation8 + $0x8] sm:$0xff] %v223
    // Predicated region
    $region34: #{tpu_custom_call.1} parent=1 // pred_check
      _
    $region35: #{tpu_custom_call.1} parent=1 // pred_check_branch
      %227 = sbr.rel (0) target = $region37
    $region36: #{tpu_custom_call.1} parent=1 // pred_region
      %s229 = ssub.s32 256, 256
      %230 = vsyncadd [#allocation5], %s229
      %s231 = sshll.u32 [#allocation8], 4
      %s232 = int_to_ptr.vmem [resolvable:$true] %s231
      %237 = dma.vmem_to_hbm [thread:$0]  %s232, 256, %s5, [#allocation5], 128, 128, 8
    $region37: #{tpu_custom_call.1} parent=1 // pred_fallthru
      _
    // Predicated region
    $region38: #{tpu_custom_call.1} parent=1 // pred_check
      _
    $region39: #{tpu_custom_call.1} parent=1 // pred_check_branch
      %239 = sbr.rel (0) target = $region41
    $region40: #{tpu_custom_call.1} parent=1 // pred_region
      %240 = dma.done [#allocation5], 256
    $region41: #{tpu_custom_call.1} parent=1 // pred_fallthru
      _
    %241 = vsyncpa [#allocation4], 1
    %242 = vsyncpa [#allocation7], 1
    %243 = vsyncpa [#allocation5], 1

</llo_original>
